<compile_context>
chip_gen: v7x
topology: tpu7x:2x2x1
jax: 0.10.0
libtpu: 0.0.40
codegen_flags: <defaults>
</compile_context>

<pallas_src>
import numpy as np
import jax
import jax.numpy as jnp
from jax.experimental import pallas as pl
from jax.experimental.pallas import tpu as pltpu

BN_EPS = 1e-5
LANE = 128
NEG_INF = -1e30


def _round_up(x, m=LANE):
    return ((x + m - 1) // m) * m


def _pad2(a, rows, cols):
    """Zero-pad a 2-D array to (rows, cols)."""
    out = jnp.zeros((rows, cols), a.dtype)
    return out.at[: a.shape[0], : a.shape[1]].set(a)


def gnn_fused_kernel(adj_ref, x_ref, w_ref, vec_ref, wd_ref, bd_ref, out_ref):
    """Entire GNN forward in a single kernel.

    Per layer (dgllife GCNLayer, eval mode), with W/Wr fused and BN folded:
        xw, xwr = h @ [W | Wr]                 (one lane-wide MXU matmul)
        hc  = relu(adj @ xw + b)               (adj@(h@W) == (adj@h)@W)
        res = relu(xwr + br)
        h   = (hc + res) * bn_scale + bn_shift
    Then dense1 + softmax; padded class lanes hold -1e30 logits -> exp == 0.
    """
    adj = adj_ref[...]
    h = x_ref[...]
    n_layers = w_ref.shape[0]
    hp = w_ref.shape[2] // 2  # padded hidden width (lane multiple)

    for l in range(n_layers):  # small fixed layer stack -> unrolled
        vec = vec_ref[l]       # (4, hp): rows = [b, br, bn_scale, bn_shift]
        xw_cat = jnp.dot(h, w_ref[l], preferred_element_type=jnp.float32)
        xw, xwr = xw_cat[:, :hp], xw_cat[:, hp:]
        hc = jnp.maximum(
            jnp.dot(adj, xw, preferred_element_type=jnp.float32) + vec[0:1, :],
            0.0)
        res = jnp.maximum(xwr + vec[1:2, :], 0.0)
        # TODO(synk): training-mode dropout omitted (eval-mode dropout = identity).
        h = (hc + res) * vec[2:3, :] + vec[3:4, :]

    logits = (jnp.dot(h, wd_ref[...], preferred_element_type=jnp.float32)
              + bd_ref[...])
    m = jnp.max(logits, axis=-1, keepdims=True)
    e = jnp.exp(logits - m)
    out_ref[...] = e / jnp.sum(e, axis=-1, keepdims=True)


def pack_params(params, n_feats, layers, n_classes):
    """Host-side packing: pad to lane multiples, fold BN, fuse W|Wr, stack layers."""
    d_pad = max(_round_up(n_feats), _round_up(max(layers)))
    c_pad = _round_up(n_classes)

    w_all, vec_all = [], []
    for p in params["gcn_layers"]:
        w_pad = _pad2(p["w"], d_pad, d_pad)
        wr_pad = _pad2(p["wr"], d_pad, d_pad)
        w_all.append(jnp.concatenate([w_pad, wr_pad], axis=1))   # (d_pad, 2*d_pad)
        scale = p["gamma"] / jnp.sqrt(p["var"] + BN_EPS)          # folded BN
        shift = p["beta"] - p["mean"] * scale
        vec_all.append(jnp.stack([
            _pad2(p["b"], 1, d_pad)[0],
            _pad2(p["br"], 1, d_pad)[0],
            _pad2(scale, 1, d_pad)[0],    # padded lanes: scale=0, shift=0 -> stay 0
            _pad2(shift, 1, d_pad)[0],
        ], axis=0))                                               # (4, d_pad)

    w_all = jnp.stack(w_all, axis=0)      # (L, d_pad, 2*d_pad)
    vec_all = jnp.stack(vec_all, axis=0)  # (L, 4, d_pad)

    wd_pad = _pad2(params["wd"], d_pad, c_pad)
    bd_pad = jnp.full((1, c_pad), NEG_INF, jnp.float32)
    bd_pad = bd_pad.at[:, :n_classes].set(params["bd"])           # pad logits -> -inf
    return w_all, vec_all, wd_pad, bd_pad, d_pad, c_pad


def gnn_forward(adj, in_feat, params, layers, n_classes=2):
    n, n_feats = in_feat.shape
    w_all, vec_all, wd_pad, bd_pad, d_pad, c_pad = pack_params(
        params, n_feats, layers, n_classes)
    x_pad = _pad2(in_feat, n, d_pad)

    vmem = pl.BlockSpec(memory_space=pltpu.MemorySpace.VMEM)
    out_pad = pl.pallas_call(
        gnn_fused_kernel,
        out_shape=jax.ShapeDtypeStruct((n, c_pad), jnp.float32),
        in_specs=[vmem] * 6,
        out_specs=vmem,
    )(adj, x_pad, w_all, vec_all, wd_pad, bd_pad)
    return out_pad[:, :n_classes]


def gnn_forward_ref(adj, x, params):
    """Pure-JAX reference implementing the same forward (unpadded)."""
    h = x
    for p in params["gcn_layers"]:
        agg = adj @ h
        a = jnp.maximum(agg @ p["w"] + p["b"], 0.0)
        r = jnp.maximum(h @ p["wr"] + p["br"], 0.0)
        o = a + r
        o = (o - p["mean"]) / jnp.sqrt(p["var"] + BN_EPS) * p["gamma"] + p["beta"]
        h = o
    logits = h @ params["wd"] + params["bd"]
    return jax.nn.softmax(logits, axis=1)


def init_params(key, n_feats, layers, n_classes=2):
    params = {"gcn_layers": []}
    in_dim = n_feats
    for out_dim in layers:
        key, kw, kb, kwr, kbr = jax.random.split(key, 5)
        params["gcn_layers"].append({
            "w": 0.1 * jax.random.normal(kw, (in_dim, out_dim), jnp.float32),
            "b": 0.1 * jax.random.normal(kb, (1, out_dim), jnp.float32),
            "wr": 0.1 * jax.random.normal(kwr, (in_dim, out_dim), jnp.float32),
            "br": 0.1 * jax.random.normal(kbr, (1, out_dim), jnp.float32),
            # Fresh BatchNorm1d parameters / running stats (PyTorch defaults).
            "gamma": jnp.ones((1, out_dim), jnp.float32),
            "beta": jnp.zeros((1, out_dim), jnp.float32),
            "mean": jnp.zeros((1, out_dim), jnp.float32),
            "var": jnp.ones((1, out_dim), jnp.float32),
        })
        in_dim = out_dim
    key, kwd, kbd = jax.random.split(key, 3)
    params["wd"] = 0.1 * jax.random.normal(kwd, (in_dim, n_classes), jnp.float32)
    params["bd"] = 0.1 * jax.random.normal(kbd, (1, n_classes), jnp.float32)
    return params


if __name__ == "__main__":
    key = jax.random.PRNGKey(0)

    N_NODES = 16          # number of graph nodes
    N_FEATS = 21          # FEAT_SIZES['onehot']
    LAYERS = [32, 32]     # GCN hidden sizes
    N_CLASSES = 2

    key, k_adj, k_feat, k_param = jax.random.split(key, 4)

    # Small random undirected graph with self-loops, dense adjacency.
    a = (jax.random.uniform(k_adj, (N_NODES, N_NODES)) > 0.7).astype(jnp.float32)
    adj = jnp.clip(a + a.T + jnp.eye(N_NODES, dtype=jnp.float32), 0.0, 1.0)

    in_feat = jax.random.normal(k_feat, (N_NODES, N_FEATS), jnp.float32)
    params = init_params(k_param, N_FEATS, LAYERS, n_classes=N_CLASSES)

    fwd = jax.jit(lambda A, x, p: gnn_forward(A, x, p, LAYERS, N_CLASSES))
    out = jax.block_until_ready(fwd(adj, in_feat, params))

    ref = gnn_forward_ref(adj, in_feat, params)
    assert out.shape == (N_NODES, N_CLASSES)
    np.testing.assert_allclose(np.asarray(out), np.asarray(ref),
                               rtol=1e-5, atol=1e-5)
    # Softmax rows sum to 1.
    np.testing.assert_allclose(np.asarray(out).sum(axis=1),
                               np.ones(N_NODES), rtol=1e-5, atol=1e-5)
    print("KERNEL_OK")
</pallas_src>

<mosaic_0001>
module attributes {stable_mosaic.version = 11 : i64} {
  func.func @gnn_fused_kernel(%arg0: memref<16x16xf32, #tpu.memory_space<vmem>>, %arg1: memref<16x128xf32, #tpu.memory_space<vmem>>, %arg2: memref<2x128x256xf32, #tpu.memory_space<vmem>>, %arg3: memref<2x4x128xf32, #tpu.memory_space<vmem>>, %arg4: memref<128x128xf32, #tpu.memory_space<vmem>>, %arg5: memref<1x128xf32, #tpu.memory_space<vmem>>, %arg6: memref<16x128xf32, #tpu.memory_space<vmem>>) attributes {dimension_semantics = [], scalar_prefetch = 0 : i64, scratch_operands = 0 : i64, tpu.core_type = #tpu.core_type<tc>} {
    %c0 = arith.constant 0 : index
    %c0_0 = arith.constant 0 : index
    %0 = vector.load %arg0[%c0, %c0_0] : memref<16x16xf32, #tpu.memory_space<vmem>>, vector<16x16xf32>
    %c0_1 = arith.constant 0 : index
    %c0_2 = arith.constant 0 : index
    %1 = vector.load %arg1[%c0_1, %c0_2] : memref<16x128xf32, #tpu.memory_space<vmem>>, vector<16x128xf32>
    %c0_3 = arith.constant 0 : index
    %c0_4 = arith.constant 0 : index
    %c0_5 = arith.constant 0 : index
    %2 = vector.load %arg3[%c0_3, %c0_4, %c0_5] : memref<2x4x128xf32, #tpu.memory_space<vmem>>, vector<1x4x128xf32>
    %3 = vector.shape_cast %2 : vector<1x4x128xf32> to vector<4x128xf32>
    %c0_6 = arith.constant 0 : index
    %c0_7 = arith.constant 0 : index
    %c0_8 = arith.constant 0 : index
    %4 = vector.load %arg2[%c0_6, %c0_7, %c0_8] : memref<2x128x256xf32, #tpu.memory_space<vmem>>, vector<1x128x256xf32>
    %5 = vector.shape_cast %4 : vector<1x128x256xf32> to vector<128x256xf32>
    %cst = arith.constant dense<0.000000e+00> : vector<16x256xf32>
    %6 = tpu.matmul %1, %5, %cst {dimension_numbers = #tpu.dot_dimension_numbers<[1], [0], [0], [1], [0, 0, 1, 1], [], []>} : vector<16x128xf32>, vector<128x256xf32>, vector<16x256xf32> -> vector<16x256xf32>
    %7 = vector.extract_strided_slice %6 {offsets = [0, 0], sizes = [16, 128], strides = [1, 1]} : vector<16x256xf32> to vector<16x128xf32>
    %8 = vector.extract_strided_slice %6 {offsets = [0, 128], sizes = [16, 128], strides = [1, 1]} : vector<16x256xf32> to vector<16x128xf32>
    %cst_9 = arith.constant dense<0.000000e+00> : vector<16x128xf32>
    %9 = tpu.matmul %0, %7, %cst_9 {dimension_numbers = #tpu.dot_dimension_numbers<[1], [0], [0], [1], [0, 0, 1, 1], [], []>} : vector<16x16xf32>, vector<16x128xf32>, vector<16x128xf32> -> vector<16x128xf32>
    %10 = vector.extract_strided_slice %3 {offsets = [0, 0], sizes = [1, 128], strides = [1, 1]} : vector<4x128xf32> to vector<1x128xf32>
    %11 = vector.broadcast %10 : vector<1x128xf32> to vector<16x128xf32>
    %12 = arith.addf %9, %11 : vector<16x128xf32>
    %cst_10 = arith.constant 0.000000e+00 : f32
    %13 = vector.broadcast %cst_10 : f32 to vector<16x128xf32>
    %14 = arith.maximumf %12, %13 : vector<16x128xf32>
    %15 = vector.extract_strided_slice %3 {offsets = [1, 0], sizes = [1, 128], strides = [1, 1]} : vector<4x128xf32> to vector<1x128xf32>
    %16 = vector.broadcast %15 : vector<1x128xf32> to vector<16x128xf32>
    %17 = arith.addf %8, %16 : vector<16x128xf32>
    %cst_11 = arith.constant 0.000000e+00 : f32
    %18 = vector.broadcast %cst_11 : f32 to vector<16x128xf32>
    %19 = arith.maximumf %17, %18 : vector<16x128xf32>
    %20 = arith.addf %14, %19 : vector<16x128xf32>
    %21 = vector.extract_strided_slice %3 {offsets = [2, 0], sizes = [1, 128], strides = [1, 1]} : vector<4x128xf32> to vector<1x128xf32>
    %22 = vector.broadcast %21 : vector<1x128xf32> to vector<16x128xf32>
    %23 = arith.mulf %20, %22 : vector<16x128xf32>
    %24 = vector.extract_strided_slice %3 {offsets = [3, 0], sizes = [1, 128], strides = [1, 1]} : vector<4x128xf32> to vector<1x128xf32>
    %25 = vector.broadcast %24 : vector<1x128xf32> to vector<16x128xf32>
    %26 = arith.addf %23, %25 : vector<16x128xf32>
    %c1 = arith.constant 1 : index
    %c0_12 = arith.constant 0 : index
    %c0_13 = arith.constant 0 : index
    %27 = vector.load %arg3[%c1, %c0_12, %c0_13] : memref<2x4x128xf32, #tpu.memory_space<vmem>>, vector<1x4x128xf32>
    %28 = vector.shape_cast %27 : vector<1x4x128xf32> to vector<4x128xf32>
    %c1_14 = arith.constant 1 : index
    %c0_15 = arith.constant 0 : index
    %c0_16 = arith.constant 0 : index
    %29 = vector.load %arg2[%c1_14, %c0_15, %c0_16] : memref<2x128x256xf32, #tpu.memory_space<vmem>>, vector<1x128x256xf32>
    %30 = vector.shape_cast %29 : vector<1x128x256xf32> to vector<128x256xf32>
    %cst_17 = arith.constant dense<0.000000e+00> : vector<16x256xf32>
    %31 = tpu.matmul %26, %30, %cst_17 {dimension_numbers = #tpu.dot_dimension_numbers<[1], [0], [0], [1], [0, 0, 1, 1], [], []>} : vector<16x128xf32>, vector<128x256xf32>, vector<16x256xf32> -> vector<16x256xf32>
    %32 = vector.extract_strided_slice %31 {offsets = [0, 0], sizes = [16, 128], strides = [1, 1]} : vector<16x256xf32> to vector<16x128xf32>
    %33 = vector.extract_strided_slice %31 {offsets = [0, 128], sizes = [16, 128], strides = [1, 1]} : vector<16x256xf32> to vector<16x128xf32>
    %cst_18 = arith.constant dense<0.000000e+00> : vector<16x128xf32>
    %34 = tpu.matmul %0, %32, %cst_18 {dimension_numbers = #tpu.dot_dimension_numbers<[1], [0], [0], [1], [0, 0, 1, 1], [], []>} : vector<16x16xf32>, vector<16x128xf32>, vector<16x128xf32> -> vector<16x128xf32>
    %35 = vector.extract_strided_slice %28 {offsets = [0, 0], sizes = [1, 128], strides = [1, 1]} : vector<4x128xf32> to vector<1x128xf32>
    %36 = vector.broadcast %35 : vector<1x128xf32> to vector<16x128xf32>
    %37 = arith.addf %34, %36 : vector<16x128xf32>
    %cst_19 = arith.constant 0.000000e+00 : f32
    %38 = vector.broadcast %cst_19 : f32 to vector<16x128xf32>
    %39 = arith.maximumf %37, %38 : vector<16x128xf32>
    %40 = vector.extract_strided_slice %28 {offsets = [1, 0], sizes = [1, 128], strides = [1, 1]} : vector<4x128xf32> to vector<1x128xf32>
    %41 = vector.broadcast %40 : vector<1x128xf32> to vector<16x128xf32>
    %42 = arith.addf %33, %41 : vector<16x128xf32>
    %cst_20 = arith.constant 0.000000e+00 : f32
    %43 = vector.broadcast %cst_20 : f32 to vector<16x128xf32>
    %44 = arith.maximumf %42, %43 : vector<16x128xf32>
    %45 = arith.addf %39, %44 : vector<16x128xf32>
    %46 = vector.extract_strided_slice %28 {offsets = [2, 0], sizes = [1, 128], strides = [1, 1]} : vector<4x128xf32> to vector<1x128xf32>
    %47 = vector.broadcast %46 : vector<1x128xf32> to vector<16x128xf32>
    %48 = arith.mulf %45, %47 : vector<16x128xf32>
    %49 = vector.extract_strided_slice %28 {offsets = [3, 0], sizes = [1, 128], strides = [1, 1]} : vector<4x128xf32> to vector<1x128xf32>
    %50 = vector.broadcast %49 : vector<1x128xf32> to vector<16x128xf32>
    %51 = arith.addf %48, %50 : vector<16x128xf32>
    %c0_21 = arith.constant 0 : index
    %c0_22 = arith.constant 0 : index
    %52 = vector.load %arg4[%c0_21, %c0_22] : memref<128x128xf32, #tpu.memory_space<vmem>>, vector<128x128xf32>
    %cst_23 = arith.constant dense<0.000000e+00> : vector<16x128xf32>
    %53 = tpu.matmul %51, %52, %cst_23 {dimension_numbers = #tpu.dot_dimension_numbers<[1], [0], [0], [1], [0, 0, 1, 1], [], []>} : vector<16x128xf32>, vector<128x128xf32>, vector<16x128xf32> -> vector<16x128xf32>
    %c0_24 = arith.constant 0 : index
    %c0_25 = arith.constant 0 : index
    %54 = vector.load %arg5[%c0_24, %c0_25] : memref<1x128xf32, #tpu.memory_space<vmem>>, vector<1x128xf32>
    %55 = vector.broadcast %54 : vector<1x128xf32> to vector<16x128xf32>
    %56 = arith.addf %53, %55 : vector<16x128xf32>
    %cst_26 = arith.constant dense<0xFF800000> : vector<16xf32>
    %57 = vector.multi_reduction <maximumf>, %56, %cst_26 [1] : vector<16x128xf32> to vector<16xf32>
    %58 = vector.shape_cast %57 : vector<16xf32> to vector<16x1xf32>
    %59 = vector.broadcast %58 : vector<16x1xf32> to vector<16x128xf32>
    %60 = arith.subf %56, %59 : vector<16x128xf32>
    %61 = math.exp %60 : vector<16x128xf32>
    %cst_27 = arith.constant dense<0.000000e+00> : vector<16xf32>
    %62 = vector.multi_reduction <add>, %61, %cst_27 [1] : vector<16x128xf32> to vector<16xf32>
    %63 = vector.shape_cast %62 : vector<16xf32> to vector<16x1xf32>
    %64 = vector.broadcast %63 : vector<16x1xf32> to vector<16x128xf32>
    %65 = arith.divf %61, %64 : vector<16x128xf32>
    %c0_28 = arith.constant 0 : index
    %c0_29 = arith.constant 0 : index
    %66 = vector.load %arg6[%c0_28, %c0_29] : memref<16x128xf32, #tpu.memory_space<vmem>>, vector<16x128xf32>
    tpu.vector_store %arg6[%c0_28, %c0_29], %65 {strides = array<i32>} : memref<16x128xf32, #tpu.memory_space<vmem>>, vector<16x128xf32>,
    return
  }
}

</mosaic_0001>

<llo_original>
// kernel: _lambda_.1
$region0: #{_lambda_.1}
  #allocation0 [shape = 'u32[]', space=smem, size = 0x4, offset = 0x4, fixed_abs, tag = 'smem constant byte address 0x4 - core index']
  #allocation1 [shape = 'u32[144,128]{1,0:T(1,128)}', space=vmem, size = 0x12000, scoped, tag = 'internal scratch']
  %s0 = inlined_call_operand.vmem [shape: f32[16,16], index: 0, kind: input, shape index: {}]
  %s1 = inlined_call_operand.vmem [shape: f32[16,128], index: 1, kind: input, shape index: {}]
  %s2 = inlined_call_operand.vmem [shape: f32[2,128,256], index: 2, kind: input, shape index: {}]
  %s3 = inlined_call_operand.vmem [shape: f32[2,4,128], index: 3, kind: input, shape index: {}]
  %s4 = inlined_call_operand.vmem [shape: f32[128,128], index: 4, kind: input, shape index: {}]
  %s5 = inlined_call_operand.vmem [shape: f32[1,128], index: 5, kind: input, shape index: {}]
  %s6 = inlined_call_operand.vmem [shape: f32[16,128], index: 6, kind: output, shape index: {}]
  %s7 = sld [smem:[#allocation0]]
  $region34: #{_lambda_.1} parent=0
    _
  %s9 = ssub.s32 1, %s7
  %s10 = scalar_select 0, %s9, %s7
  // Predicated region
  $region2: #{_lambda_.1} parent=0 // pred_check
    _
  $region3: #{_lambda_.1} parent=0 // pred_check_branch
    %12 = sbr.rel (0) target = $region5
  $region4: #{_lambda_.1} parent=0 // pred_region
    _
  $region5: #{_lambda_.1} parent=0 // pred_fallthru
    _
  // Predicated region
  $region6: #{_lambda_.1} parent=0 // pred_check
    _
  $region7: #{_lambda_.1} parent=0 // pred_check_branch
    %14 = sbr.rel (0) target = $region9
  $region8: #{_lambda_.1} parent=0 // pred_region
    _
  $region9: #{_lambda_.1} parent=0 // pred_fallthru
    _
  // Predicated region
  $region10: #{_lambda_.1} parent=0 // pred_check
    _
  $region11: #{_lambda_.1} parent=0 // pred_check_branch
    %16 = sbr.rel (0) target = $region13
  $region12: #{_lambda_.1} parent=0 // pred_region
    _
  $region13: #{_lambda_.1} parent=0 // pred_fallthru
    _
  // Predicated region
  $region14: #{_lambda_.1} parent=0 // pred_check
    _
  $region15: #{_lambda_.1} parent=0 // pred_check_branch
    %18 = sbr.rel (0) target = $region17
  $region16: #{_lambda_.1} parent=0 // pred_region
    _
  $region17: #{_lambda_.1} parent=0 // pred_fallthru
    _
  // Predicated region
  $region18: #{_lambda_.1} parent=0 // pred_check
    _
  $region19: #{_lambda_.1} parent=0 // pred_check_branch
    %20 = sbr.rel (0) target = $region21
  $region20: #{_lambda_.1} parent=0 // pred_region
    _
  $region21: #{_lambda_.1} parent=0 // pred_fallthru
    _
  // Predicated region
  $region22: #{_lambda_.1} parent=0 // pred_check
    _
  $region23: #{_lambda_.1} parent=0 // pred_check_branch
    %22 = sbr.rel (0) target = $region25
  $region24: #{_lambda_.1} parent=0 // pred_region
    _
  $region25: #{_lambda_.1} parent=0 // pred_fallthru
    _
  %v23 = vld [vmem:[%s0] sm:$0xff]
  %v24 = vld [vmem:[%s0 + $0x8] sm:$0xff]
  %v25 = vld [vmem:[%s1] sm:$0xff]
  %v26 = vld [vmem:[%s1 + $0x8] sm:$0xff]
  %v27 = vld [vmem:[%s3] sm:$0xf]
  %v28 = vld [vmem:[%s2] sm:$0xff]
  %v29 = vld [vmem:[%s2 + $0x8] sm:$0xff]
  %v30 = vld [vmem:[%s2 + $0x10] sm:$0xff]
  %v31 = vld [vmem:[%s2 + $0x18] sm:$0xff]
  %v32 = vld [vmem:[%s2 + $0x20] sm:$0xff]
  %v33 = vld [vmem:[%s2 + $0x28] sm:$0xff]
  %v34 = vld [vmem:[%s2 + $0x30] sm:$0xff]
  %v35 = vld [vmem:[%s2 + $0x38] sm:$0xff]
  %v36 = vld [vmem:[%s2 + $0x40] sm:$0xff]
  %v37 = vld [vmem:[%s2 + $0x48] sm:$0xff]
  %v38 = vld [vmem:[%s2 + $0x50] sm:$0xff]
  %v39 = vld [vmem:[%s2 + $0x58] sm:$0xff]
  %v40 = vld [vmem:[%s2 + $0x60] sm:$0xff]
  %v41 = vld [vmem:[%s2 + $0x68] sm:$0xff]
  %v42 = vld [vmem:[%s2 + $0x70] sm:$0xff]
  %v43 = vld [vmem:[%s2 + $0x78] sm:$0xff]
  %v44 = vld [vmem:[%s2 + $0x80] sm:$0xff]
  %v45 = vld [vmem:[%s2 + $0x88] sm:$0xff]
  %v46 = vld [vmem:[%s2 + $0x90] sm:$0xff]
  %v47 = vld [vmem:[%s2 + $0x98] sm:$0xff]
  %v48 = vld [vmem:[%s2 + $0xa0] sm:$0xff]
  %v49 = vld [vmem:[%s2 + $0xa8] sm:$0xff]
  %v50 = vld [vmem:[%s2 + $0xb0] sm:$0xff]
  %v51 = vld [vmem:[%s2 + $0xb8] sm:$0xff]
  %v52 = vld [vmem:[%s2 + $0xc0] sm:$0xff]
  %v53 = vld [vmem:[%s2 + $0xc8] sm:$0xff]
  %v54 = vld [vmem:[%s2 + $0xd0] sm:$0xff]
  %v55 = vld [vmem:[%s2 + $0xd8] sm:$0xff]
  %v56 = vld [vmem:[%s2 + $0xe0] sm:$0xff]
  %v57 = vld [vmem:[%s2 + $0xe8] sm:$0xff]
  %v58 = vld [vmem:[%s2 + $0xf0] sm:$0xff]
  %v59 = vld [vmem:[%s2 + $0xf8] sm:$0xff]
  %60 = vmatprep.subr.mxu0 %v29
  %61 = vmatpush1.msra.mxu0 %v28
  %62 = vmatprep.subr.mxu0 %v31
  %63 = vmatpush1.msra.mxu0 %v30
  %64 = vmatprep.subr.mxu0 %v33
  %65 = vmatpush1.msra.mxu0 %v32
  %66 = vmatprep.subr.mxu0 %v35
  %67 = vmatpush1.msra.mxu0 %v34
  %68 = vmatprep.subr.mxu0 %v37
  %69 = vmatpush1.msra.mxu0 %v36
  %70 = vmatprep.subr.mxu0 %v39
  %71 = vmatpush1.msra.mxu0 %v38
  %72 = vmatprep.subr.mxu0 %v41
  %73 = vmatpush1.msra.mxu0 %v40
  %74 = vmatprep.subr.mxu0 %v43
  %75 = vmatpush1.msra.mxu0 %v42
  %76 = vmatprep.subr.mxu0 %v45
  %77 = vmatpush1.msra.mxu0 %v44
  %78 = vmatprep.subr.mxu0 %v47
  %79 = vmatpush1.msra.mxu0 %v46
  %80 = vmatprep.subr.mxu0 %v49
  %81 = vmatpush1.msra.mxu0 %v48
  %82 = vmatprep.subr.mxu0 %v51
  %83 = vmatpush1.msra.mxu0 %v50
  %84 = vmatprep.subr.mxu0 %v53
  %85 = vmatpush1.msra.mxu0 %v52
  %86 = vmatprep.subr.mxu0 %v55
  %87 = vmatpush1.msra.mxu0 %v54
  %88 = vmatprep.subr.mxu0 %v57
  %89 = vmatpush1.msra.mxu0 %v56
  %90 = vmatprep.subr.mxu0 %v59
  %91 = vmatpush1.msra.mxu0 %v58
  %92 = vmatprep.subr.mxu0 0.0
  %93 = vmatpush1.msra.mxu0 0.0
  %94 = vmatprep.subr.mxu0 0.0
  %95 = vmatpush1.msra.mxu0 0.0
  %96 = vmatprep.subr.mxu0 0.0
  %97 = vmatpush1.msra.mxu0 0.0
  %98 = vmatprep.subr.mxu0 0.0
  %99 = vmatpush1.msra.mxu0 0.0
  %100 = vmatprep.subr.mxu0 0.0
  %101 = vmatpush1.msra.mxu0 0.0
  %102 = vmatprep.subr.mxu0 0.0
  %103 = vmatpush1.msra.mxu0 0.0
  %104 = vmatprep.subr.mxu0 0.0
  %105 = vmatpush1.msra.mxu0 0.0
  %106 = vmatprep.subr.mxu0 0.0
  %107 = vmatpush1.msra.mxu0 0.0
  %108 = vmatprep.subr.mxu0 0.0
  %109 = vmatpush1.msra.mxu0 0.0
  %110 = vmatprep.subr.mxu0 0.0
  %111 = vmatpush1.msra.mxu0 0.0
  %112 = vmatprep.subr.mxu0 0.0
  %113 = vmatpush1.msra.mxu0 0.0
  %114 = vmatprep.subr.mxu0 0.0
  %115 = vmatpush1.msra.mxu0 0.0
  %116 = vmatprep.subr.mxu0 0.0
  %117 = vmatpush1.msra.mxu0 0.0
  %118 = vmatprep.subr.mxu0 0.0
  %119 = vmatpush1.msra.mxu0 0.0
  %120 = vmatprep.subr.mxu0 0.0
  %121 = vmatpush1.msra.mxu0 0.0
  %122 = vmatprep.subr.mxu0 0.0
  %123 = vmatpush1.msra.mxu0 0.0
  %124 = vmatprep.mubr.f32.mxu0 0.0
  %125 = vmatmul.mubr.f32.gmra.mrb[0].mxu0 %v25
  %v126 = vpop.f32.mrb[0].mxu0
  %v127 = vadd.f32 0.0, %v126
  %v128 = vpop.f32.mrb[0].mxu0
  %v129 = vadd.f32 0.0, %v128
  %130 = vmatprep.mubr.f32.mxu0 0.0
  %131 = vmatmul.mubr.f32.gmra.mrb[0].mxu0 %v26
  %v132 = vpop.f32.mrb[0].mxu0
  %v133 = vadd.f32 0.0, %v132
  %v134 = vpop.f32.mrb[0].mxu0
  %v135 = vadd.f32 0.0, %v134
  %136 = vdwg.mxu0
  %v137 = vlaneseq
  %v138 = vshrl.u32 %v137, 7
  %v139 = vsub.s32 0, %v138
  %v140 = vrot.slane %v27, %v139
  %vm141 = vcmask 130048
  %v143 = vsel %vm141, %v23, 0
  %v146 = vsel %vm141, %v24, 0
  %148 = vmatprep.subr.mxu0 0.0
  %149 = vmatpush1.msra.mxu0 %v127
  %150 = vmatprep.subr.mxu0 0.0
  %151 = vmatpush1.msra.mxu0 %v133
  %152 = vmatprep.subr.mxu0 0.0
  %153 = vmatpush1.msra.mxu0 0.0
  %154 = vmatprep.subr.mxu0 0.0
  %155 = vmatpush1.msra.mxu0 0.0
  %156 = vmatprep.subr.mxu0 0.0
  %157 = vmatpush1.msra.mxu0 0.0
  %158 = vmatprep.subr.mxu0 0.0
  %159 = vmatpush1.msra.mxu0 0.0
  %160 = vmatprep.subr.mxu0 0.0
  %161 = vmatpush1.msra.mxu0 0.0
  %162 = vmatprep.subr.mxu0 0.0
  %163 = vmatpush1.msra.mxu0 0.0
  %164 = vmatprep.subr.mxu0 0.0
  %165 = vmatpush1.msra.mxu0 0.0
  %166 = vmatprep.subr.mxu0 0.0
  %167 = vmatpush1.msra.mxu0 0.0
  %168 = vmatprep.subr.mxu0 0.0
  %169 = vmatpush1.msra.mxu0 0.0
  %170 = vmatprep.subr.mxu0 0.0
  %171 = vmatpush1.msra.mxu0 0.0
  %172 = vmatprep.subr.mxu0 0.0
  %173 = vmatpush1.msra.mxu0 0.0
  %174 = vmatprep.subr.mxu0 0.0
  %175 = vmatpush1.msra.mxu0 0.0
  %176 = vmatprep.subr.mxu0 0.0
  %177 = vmatpush1.msra.mxu0 0.0
  %178 = vmatprep.subr.mxu0 0.0
  %179 = vmatpush1.msra.mxu0 0.0
  %180 = vmatprep.subr.mxu0 0.0
  %181 = vmatpush1.msra.mxu0 0.0
  %182 = vmatprep.subr.mxu0 0.0
  %183 = vmatpush1.msra.mxu0 0.0
  %184 = vmatprep.subr.mxu0 0.0
  %185 = vmatpush1.msra.mxu0 0.0
  %186 = vmatprep.subr.mxu0 0.0
  %187 = vmatpush1.msra.mxu0 0.0
  %188 = vmatprep.subr.mxu0 0.0
  %189 = vmatpush1.msra.mxu0 0.0
  %190 = vmatprep.subr.mxu0 0.0
  %191 = vmatpush1.msra.mxu0 0.0
  %192 = vmatprep.subr.mxu0 0.0
  %193 = vmatpush1.msra.mxu0 0.0
  %194 = vmatprep.subr.mxu0 0.0
  %195 = vmatpush1.msra.mxu0 0.0
  %196 = vmatprep.subr.mxu0 0.0
  %197 = vmatpush1.msra.mxu0 0.0
  %198 = vmatprep.subr.mxu0 0.0
  %199 = vmatpush1.msra.mxu0 0.0
  %200 = vmatprep.subr.mxu0 0.0
  %201 = vmatpush1.msra.mxu0 0.0
  %202 = vmatprep.subr.mxu0 0.0
  %203 = vmatpush1.msra.mxu0 0.0
  %204 = vmatprep.subr.mxu0 0.0
  %205 = vmatpush1.msra.mxu0 0.0
  %206 = vmatprep.subr.mxu0 0.0
  %207 = vmatpush1.msra.mxu0 0.0
  %208 = vmatprep.subr.mxu0 0.0
  %209 = vmatpush1.msra.mxu0 0.0
  %210 = vmatprep.subr.mxu0 0.0
  %211 = vmatpush1.msra.mxu0 0.0
  %212 = vmatprep.mubr.f32.mxu0 0.0
  %213 = vmatmul.mubr.f32.gmra.mrb[0].mxu0 %v143
  %v214 = vpop.f32.mrb[0].mxu0
  %v215 = vadd.f32 %v140, %v214
  %v216 = vpop.f32.mrb[0].mxu0
  %217 = vmatprep.mubr.f32.mxu0 0.0
  %218 = vmatmul.mubr.f32.gmra.mrb[0].mxu0 %v146
  %v219 = vpop.f32.mrb[0].mxu0
  %v220 = vadd.f32 %v140, %v219
  %v221 = vpop.f32.mrb[0].mxu0
  %222 = vdwg.mxu0
  %v223 = vmax.f32 %v215, 0.0
  %v224 = vmax.f32 %v220, 0.0
  %v225 = vlaneseq
  %v226 = vshrl.u32 %v225, 7
  %v227 = vsub.s32 1, %v226
  %v228 = vrot.slane %v27, %v227
  %v229 = vadd.f32 %v129, %v228
  %v230 = vadd.f32 %v135, %v228
  %v231 = vmax.f32 %v229, 0.0
  %v232 = vmax.f32 %v230, 0.0
  %v233 = vadd.f32 %v223, %v231
  %v234 = vadd.f32 %v224, %v232
  %v235 = vlaneseq
  %v236 = vshrl.u32 %v235, 7
  %v237 = vsub.s32 2, %v236
  %v238 = vrot.slane %v27, %v237
  %v239 = vmul.f32 %v233, %v238
  %v240 = vmul.f32 %v234, %v238
  %v241 = vlaneseq
  %v242 = vshrl.u32 %v241, 7
  %v243 = vsub.s32 3, %v242
  %v244 = vrot.slane %v27, %v243
  %v245 = vadd.f32 %v239, %v244
  %v246 = vadd.f32 %v240, %v244
  %s247 = scalar_lea.vmem %s3, 4
  %v248 = vld [vmem:[%s247] sm:$0xf]
  %s249 = scalar_lea.vmem %s2, 256
  %v250 = vld [vmem:[%s249] sm:$0xff]
  %v251 = vld [vmem:[%s249 + $0x8] sm:$0xff]
  %v252 = vld [vmem:[%s249 + $0x10] sm:$0xff]
  %v253 = vld [vmem:[%s249 + $0x18] sm:$0xff]
  %v254 = vld [vmem:[%s249 + $0x20] sm:$0xff]
  %v255 = vld [vmem:[%s249 + $0x28] sm:$0xff]
  %v256 = vld [vmem:[%s249 + $0x30] sm:$0xff]
  %v257 = vld [vmem:[%s249 + $0x38] sm:$0xff]
  %v258 = vld [vmem:[%s249 + $0x40] sm:$0xff]
  %v259 = vld [vmem:[%s249 + $0x48] sm:$0xff]
  %v260 = vld [vmem:[%s249 + $0x50] sm:$0xff]
  %v261 = vld [vmem:[%s249 + $0x58] sm:$0xff]
  %v262 = vld [vmem:[%s249 + $0x60] sm:$0xff]
  %v263 = vld [vmem:[%s249 + $0x68] sm:$0xff]
  %v264 = vld [vmem:[%s249 + $0x70] sm:$0xff]
  %v265 = vld [vmem:[%s249 + $0x78] sm:$0xff]
  %v266 = vld [vmem:[%s249 + $0x80] sm:$0xff]
  %v267 = vld [vmem:[%s249 + $0x88] sm:$0xff]
  %v268 = vld [vmem:[%s249 + $0x90] sm:$0xff]
  %v269 = vld [vmem:[%s249 + $0x98] sm:$0xff]
  %v270 = vld [vmem:[%s249 + $0xa0] sm:$0xff]
  %v271 = vld [vmem:[%s249 + $0xa8] sm:$0xff]
  %v272 = vld [vmem:[%s249 + $0xb0] sm:$0xff]
  %v273 = vld [vmem:[%s249 + $0xb8] sm:$0xff]
  %v274 = vld [vmem:[%s249 + $0xc0] sm:$0xff]
  %v275 = vld [vmem:[%s249 + $0xc8] sm:$0xff]
  %v276 = vld [vmem:[%s249 + $0xd0] sm:$0xff]
  %v277 = vld [vmem:[%s249 + $0xd8] sm:$0xff]
  %v278 = vld [vmem:[%s249 + $0xe0] sm:$0xff]
  %v279 = vld [vmem:[%s249 + $0xe8] sm:$0xff]
  %v280 = vld [vmem:[%s249 + $0xf0] sm:$0xff]
  %v281 = vld [vmem:[%s249 + $0xf8] sm:$0xff]
  %282 = vmatprep.subr.mxu0 %v251
  %283 = vmatpush1.msra.mxu0 %v250
  %284 = vmatprep.subr.mxu0 %v253
  %285 = vmatpush1.msra.mxu0 %v252
  %286 = vmatprep.subr.mxu0 %v255
  %287 = vmatpush1.msra.mxu0 %v254
  %288 = vmatprep.subr.mxu0 %v257
  %289 = vmatpush1.msra.mxu0 %v256
  %290 = vmatprep.subr.mxu0 %v259
  %291 = vmatpush1.msra.mxu0 %v258
  %292 = vmatprep.subr.mxu0 %v261
  %293 = vmatpush1.msra.mxu0 %v260
  %294 = vmatprep.subr.mxu0 %v263
  %295 = vmatpush1.msra.mxu0 %v262
  %296 = vmatprep.subr.mxu0 %v265
  %297 = vmatpush1.msra.mxu0 %v264
  %298 = vmatprep.subr.mxu0 %v267
  %299 = vmatpush1.msra.mxu0 %v266
  %300 = vmatprep.subr.mxu0 %v269
  %301 = vmatpush1.msra.mxu0 %v268
  %302 = vmatprep.subr.mxu0 %v271
  %303 = vmatpush1.msra.mxu0 %v270
  %304 = vmatprep.subr.mxu0 %v273
  %305 = vmatpush1.msra.mxu0 %v272
  %306 = vmatprep.subr.mxu0 %v275
  %307 = vmatpush1.msra.mxu0 %v274
  %308 = vmatprep.subr.mxu0 %v277
  %309 = vmatpush1.msra.mxu0 %v276
  %310 = vmatprep.subr.mxu0 %v279
  %311 = vmatpush1.msra.mxu0 %v278
  %312 = vmatprep.subr.mxu0 %v281
  %313 = vmatpush1.msra.mxu0 %v280
  %314 = vmatprep.subr.mxu0 0.0
  %315 = vmatpush1.msra.mxu0 0.0
  %316 = vmatprep.subr.mxu0 0.0
  %317 = vmatpush1.msra.mxu0 0.0
  %318 = vmatprep.subr.mxu0 0.0
  %319 = vmatpush1.msra.mxu0 0.0
  %320 = vmatprep.subr.mxu0 0.0
  %321 = vmatpush1.msra.mxu0 0.0
  %322 = vmatprep.subr.mxu0 0.0
  %323 = vmatpush1.msra.mxu0 0.0
  %324 = vmatprep.subr.mxu0 0.0
  %325 = vmatpush1.msra.mxu0 0.0
  %326 = vmatprep.subr.mxu0 0.0
  %327 = vmatpush1.msra.mxu0 0.0
  %328 = vmatprep.subr.mxu0 0.0
  %329 = vmatpush1.msra.mxu0 0.0
  %330 = vmatprep.subr.mxu0 0.0
  %331 = vmatpush1.msra.mxu0 0.0
  %332 = vmatprep.subr.mxu0 0.0
  %333 = vmatpush1.msra.mxu0 0.0
  %334 = vmatprep.subr.mxu0 0.0
  %335 = vmatpush1.msra.mxu0 0.0
  %336 = vmatprep.subr.mxu0 0.0
  %337 = vmatpush1.msra.mxu0 0.0
  %338 = vmatprep.subr.mxu0 0.0
  %339 = vmatpush1.msra.mxu0 0.0
  %340 = vmatprep.subr.mxu0 0.0
  %341 = vmatpush1.msra.mxu0 0.0
  %342 = vmatprep.subr.mxu0 0.0
  %343 = vmatpush1.msra.mxu0 0.0
  %344 = vmatprep.subr.mxu0 0.0
  %345 = vmatpush1.msra.mxu0 0.0
  %346 = vmatprep.mubr.f32.mxu0 0.0
  %347 = vmatmul.mubr.f32.gmra.mrb[0].mxu0 %v245
  %v348 = vpop.f32.mrb[0].mxu0
  %v349 = vadd.f32 0.0, %v348
  %v350 = vpop.f32.mrb[0].mxu0
  %v351 = vadd.f32 0.0, %v350
  %352 = vmatprep.mubr.f32.mxu0 0.0
  %353 = vmatmul.mubr.f32.gmra.mrb[0].mxu0 %v246
  %v354 = vpop.f32.mrb[0].mxu0
  %v355 = vadd.f32 0.0, %v354
  %v356 = vpop.f32.mrb[0].mxu0
  %v357 = vadd.f32 0.0, %v356
  %358 = vdwg.mxu0
  %v359 = vlaneseq
  %v360 = vshrl.u32 %v359, 7
  %v361 = vsub.s32 0, %v360
  %v362 = vrot.slane %v248, %v361
  %363 = vmatprep.subr.mxu0 0.0
  %364 = vmatpush1.msra.mxu0 %v349
  %365 = vmatprep.subr.mxu0 0.0
  %366 = vmatpush1.msra.mxu0 %v355
  %367 = vmatprep.subr.mxu0 0.0
  %368 = vmatpush1.msra.mxu0 0.0
  %369 = vmatprep.subr.mxu0 0.0
  %370 = vmatpush1.msra.mxu0 0.0
  %371 = vmatprep.subr.mxu0 0.0
  %372 = vmatpush1.msra.mxu0 0.0
  %373 = vmatprep.subr.mxu0 0.0
  %374 = vmatpush1.msra.mxu0 0.0
  %375 = vmatprep.subr.mxu0 0.0
  %376 = vmatpush1.msra.mxu0 0.0
  %377 = vmatprep.subr.mxu0 0.0
  %378 = vmatpush1.msra.mxu0 0.0
  %379 = vmatprep.subr.mxu0 0.0
  %380 = vmatpush1.msra.mxu0 0.0
  %381 = vmatprep.subr.mxu0 0.0
  %382 = vmatpush1.msra.mxu0 0.0
  %383 = vmatprep.subr.mxu0 0.0
  %384 = vmatpush1.msra.mxu0 0.0
  %385 = vmatprep.subr.mxu0 0.0
  %386 = vmatpush1.msra.mxu0 0.0
  %387 = vmatprep.subr.mxu0 0.0
  %388 = vmatpush1.msra.mxu0 0.0
  %389 = vmatprep.subr.mxu0 0.0
  %390 = vmatpush1.msra.mxu0 0.0
  %391 = vmatprep.subr.mxu0 0.0
  %392 = vmatpush1.msra.mxu0 0.0
  %393 = vmatprep.subr.mxu0 0.0
  %394 = vmatpush1.msra.mxu0 0.0
  %395 = vmatprep.subr.mxu0 0.0
  %396 = vmatpush1.msra.mxu0 0.0
  %397 = vmatprep.subr.mxu0 0.0
  %398 = vmatpush1.msra.mxu0 0.0
  %399 = vmatprep.subr.mxu0 0.0
  %400 = vmatpush1.msra.mxu0 0.0
  %401 = vmatprep.subr.mxu0 0.0
  %402 = vmatpush1.msra.mxu0 0.0
  %403 = vmatprep.subr.mxu0 0.0
  %404 = vmatpush1.msra.mxu0 0.0
  %405 = vmatprep.subr.mxu0 0.0
  %406 = vmatpush1.msra.mxu0 0.0
  %407 = vmatprep.subr.mxu0 0.0
  %408 = vmatpush1.msra.mxu0 0.0
  %409 = vmatprep.subr.mxu0 0.0
  %410 = vmatpush1.msra.mxu0 0.0
  %411 = vmatprep.subr.mxu0 0.0
  %412 = vmatpush1.msra.mxu0 0.0
  %413 = vmatprep.subr.mxu0 0.0
  %414 = vmatpush1.msra.mxu0 0.0
  %415 = vmatprep.subr.mxu0 0.0
  %416 = vmatpush1.msra.mxu0 0.0
  %417 = vmatprep.subr.mxu0 0.0
  %418 = vmatpush1.msra.mxu0 0.0
  %419 = vmatprep.subr.mxu0 0.0
  %420 = vmatpush1.msra.mxu0 0.0
  %421 = vmatprep.subr.mxu0 0.0
  %422 = vmatpush1.msra.mxu0 0.0
  %423 = vmatprep.subr.mxu0 0.0
  %424 = vmatpush1.msra.mxu0 0.0
  %425 = vmatprep.subr.mxu0 0.0
  %426 = vmatpush1.msra.mxu0 0.0
  %427 = vmatprep.mubr.f32.mxu0 0.0
  %428 = vmatmul.mubr.f32.gmra.mrb[0].mxu0 %v143
  %v429 = vpop.f32.mrb[0].mxu0
  %v430 = vadd.f32 %v362, %v429
  %v431 = vpop.f32.mrb[0].mxu0
  %432 = vmatprep.mubr.f32.mxu0 0.0
  %433 = vmatmul.mubr.f32.gmra.mrb[0].mxu0 %v146
  %v434 = vpop.f32.mrb[0].mxu0
  %v435 = vadd.f32 %v362, %v434
  %v436 = vpop.f32.mrb[0].mxu0
  %437 = vdwg.mxu0
  %v438 = vmax.f32 %v430, 0.0
  %v439 = vmax.f32 %v435, 0.0
  %v440 = vlaneseq
  %v441 = vshrl.u32 %v440, 7
  %v442 = vsub.s32 1, %v441
  %v443 = vrot.slane %v248, %v442
  %v444 = vadd.f32 %v351, %v443
  %v445 = vadd.f32 %v357, %v443
  %v446 = vmax.f32 %v444, 0.0
  %v447 = vmax.f32 %v445, 0.0
  %v448 = vadd.f32 %v438, %v446
  %v449 = vadd.f32 %v439, %v447
  %v450 = vlaneseq
  %v451 = vshrl.u32 %v450, 7
  %v452 = vsub.s32 2, %v451
  %v453 = vrot.slane %v248, %v452
  %v454 = vmul.f32 %v448, %v453
  %v455 = vmul.f32 %v449, %v453
  %v456 = vlaneseq
  %v457 = vshrl.u32 %v456, 7
  %v458 = vsub.s32 3, %v457
  %v459 = vrot.slane %v248, %v458
  %v460 = vadd.f32 %v454, %v459
  %v461 = vadd.f32 %v455, %v459
  %v462 = vld [vmem:[%s4] sm:$0xff]
  %v463 = vld [vmem:[%s4 + $0x8] sm:$0xff]
  %v464 = vld [vmem:[%s4 + $0x10] sm:$0xff]
  %v465 = vld [vmem:[%s4 + $0x18] sm:$0xff]
  %v466 = vld [vmem:[%s4 + $0x20] sm:$0xff]
  %v467 = vld [vmem:[%s4 + $0x28] sm:$0xff]
  %v468 = vld [vmem:[%s4 + $0x30] sm:$0xff]
  %v469 = vld [vmem:[%s4 + $0x38] sm:$0xff]
  %v470 = vld [vmem:[%s4 + $0x40] sm:$0xff]
  %v471 = vld [vmem:[%s4 + $0x48] sm:$0xff]
  %v472 = vld [vmem:[%s4 + $0x50] sm:$0xff]
  %v473 = vld [vmem:[%s4 + $0x58] sm:$0xff]
  %v474 = vld [vmem:[%s4 + $0x60] sm:$0xff]
  %v475 = vld [vmem:[%s4 + $0x68] sm:$0xff]
  %v476 = vld [vmem:[%s4 + $0x70] sm:$0xff]
  %v477 = vld [vmem:[%s4 + $0x78] sm:$0xff]
  %v478 = vld [vmem:[%s5] sm:$0x1]
  %v480 = vlaneseq
  %v481 = vshrl.u32 %v480, 7
  %v482 = vsub.s32 0, %v481
  %v483 = vrot.slane %v478, %v482
  %485 = vmatprep.subr.mxu0 0.0
  %486 = vmatpush1.msra.mxu0 %v462
  %487 = vmatprep.subr.mxu0 0.0
  %488 = vmatpush1.msra.mxu0 %v463
  %489 = vmatprep.subr.mxu0 0.0
  %490 = vmatpush1.msra.mxu0 %v464
  %491 = vmatprep.subr.mxu0 0.0
  %492 = vmatpush1.msra.mxu0 %v465
  %493 = vmatprep.subr.mxu0 0.0
  %494 = vmatpush1.msra.mxu0 %v466
  %495 = vmatprep.subr.mxu0 0.0
  %496 = vmatpush1.msra.mxu0 %v467
  %497 = vmatprep.subr.mxu0 0.0
  %498 = vmatpush1.msra.mxu0 %v468
  %499 = vmatprep.subr.mxu0 0.0
  %500 = vmatpush1.msra.mxu0 %v469
  %501 = vmatprep.subr.mxu0 0.0
  %502 = vmatpush1.msra.mxu0 %v470
  %503 = vmatprep.subr.mxu0 0.0
  %504 = vmatpush1.msra.mxu0 %v471
  %505 = vmatprep.subr.mxu0 0.0
  %506 = vmatpush1.msra.mxu0 %v472
  %507 = vmatprep.subr.mxu0 0.0
  %508 = vmatpush1.msra.mxu0 %v473
  %509 = vmatprep.subr.mxu0 0.0
  %510 = vmatpush1.msra.mxu0 %v474
  %511 = vmatprep.subr.mxu0 0.0
  %512 = vmatpush1.msra.mxu0 %v475
  %513 = vmatprep.subr.mxu0 0.0
  %514 = vmatpush1.msra.mxu0 %v476
  %515 = vmatprep.subr.mxu0 0.0
  %516 = vmatpush1.msra.mxu0 %v477
  %517 = vmatprep.subr.mxu0 0.0
  %518 = vmatpush1.msra.mxu0 0.0
  %519 = vmatprep.subr.mxu0 0.0
  %520 = vmatpush1.msra.mxu0 0.0
  %521 = vmatprep.subr.mxu0 0.0
  %522 = vmatpush1.msra.mxu0 0.0
  %523 = vmatprep.subr.mxu0 0.0
  %524 = vmatpush1.msra.mxu0 0.0
  %525 = vmatprep.subr.mxu0 0.0
  %526 = vmatpush1.msra.mxu0 0.0
  %527 = vmatprep.subr.mxu0 0.0
  %528 = vmatpush1.msra.mxu0 0.0
  %529 = vmatprep.subr.mxu0 0.0
  %530 = vmatpush1.msra.mxu0 0.0
  %531 = vmatprep.subr.mxu0 0.0
  %532 = vmatpush1.msra.mxu0 0.0
  %533 = vmatprep.subr.mxu0 0.0
  %534 = vmatpush1.msra.mxu0 0.0
  %535 = vmatprep.subr.mxu0 0.0
  %536 = vmatpush1.msra.mxu0 0.0
  %537 = vmatprep.subr.mxu0 0.0
  %538 = vmatpush1.msra.mxu0 0.0
  %539 = vmatprep.subr.mxu0 0.0
  %540 = vmatpush1.msra.mxu0 0.0
  %541 = vmatprep.subr.mxu0 0.0
  %542 = vmatpush1.msra.mxu0 0.0
  %543 = vmatprep.subr.mxu0 0.0
  %544 = vmatpush1.msra.mxu0 0.0
  %545 = vmatprep.subr.mxu0 0.0
  %546 = vmatpush1.msra.mxu0 0.0
  %547 = vmatprep.subr.mxu0 0.0
  %548 = vmatpush1.msra.mxu0 0.0
  %549 = vmatprep.mubr.f32.mxu0 0.0
  %550 = vmatmul.mubr.f32.gmra.mrb[0].mxu0 %v460
  %v551 = vpop.f32.mrb[0].mxu0
  %v552 = vadd.f32 %v483, %v551
  %v553 = vpop.f32.mrb[0].mxu0
  %554 = vmatprep.mubr.f32.mxu0 0.0
  %555 = vmatmul.mubr.f32.gmra.mrb[0].mxu0 %v461
  %v556 = vpop.f32.mrb[0].mxu0
  %v557 = vadd.f32 %v483, %v556
  %v558 = vpop.f32.mrb[0].mxu0
  %559 = vdwg.mxu0
  %560 = vmax.xlane.f32.xlu0 %v552
  %v561 = vpop.xlane.xlu0 %560
  %562 = vmax.xlane.f32.xlu0 %v557
  %v563 = vpop.xlane.xlu0 %562
  %v564 = vsub.f32 %v552, %v561
  %v565 = vsub.f32 %v557, %v563
  %v566 = vmul.f32 %v564, 1.442695
  %v567 = vpow.pop %v566
  %v568 = vmul.f32 %v565, 1.442695
  %v569 = vpow.pop %v568
  %570 = vadd.xlane.f32.xlu0 %v567
  %v571 = vpop.xlane.xlu0 %570
  %572 = vadd.xlane.f32.xlu0 %v569
  %v573 = vpop.xlane.xlu0 %572
  %v574 = vrcp.pop %v571
  %v575 = vmul.f32 %v567, %v574
  %v576 = vrcp.pop %v573
  %v577 = vmul.f32 %v569, %v576
  %578 = vst [vmem:[%s6] sm:$0xff] %v575
  %579 = vst [vmem:[%s6 + $0x8] sm:$0xff] %v577
  // Predicated region
  $region26: #{_lambda_.1} parent=0 // pred_check
    _
  $region27: #{_lambda_.1} parent=0 // pred_check_branch
    %581 = sbr.rel (0) target = $region29
  $region28: #{_lambda_.1} parent=0 // pred_region
    _
  $region29: #{_lambda_.1} parent=0 // pred_fallthru
    _
  // Predicated region
  $region30: #{_lambda_.1} parent=0 // pred_check
    _
  $region31: #{_lambda_.1} parent=0 // pred_check_branch
    %583 = sbr.rel (0) target = $region33
  $region32: #{_lambda_.1} parent=0 // pred_region
    _
  $region33: #{_lambda_.1} parent=0 // pred_fallthru
    _

</llo_original>
